<compile_context>
chip_gen: v7x
topology: tpu7x:2x2x1
jax: 0.10.0
libtpu: 0.0.40
codegen_flags: <defaults>
</compile_context>

<pallas_src>
import functools

import numpy as np
import jax
import jax.numpy as jnp
from jax.experimental import pallas as pl
from jax.experimental.pallas import tpu as pltpu

NEG_SLOPE = 0.01          # PyTorch LeakyReLU default

H = 15                    # spatial size (must be 15 so 4*15*15 == 900)
HP = H + 2                # zero-padded spatial size (17)
FLAT = HP * HP            # flattened padded grid (289)
NOUT = H * H              # real output pixels per channel (225)
MARGIN = HP + 1           # max |tap shift| in flattened coords (18)
BUFW = 384                # lane width of the flattened buffers (3 * 128)

CIN1, COUT1 = 2, 8
CIN2, COUT2 = 8, 4


# ----------------------------------------------------------------------------
# Constant 0/1 position tables (built once with numpy -> baked as constants)
#   mask : zeroes the padded-grid border + shift margins (emulates torch zero
#          padding for the second conv).
#   scat : scatters the raw (ci, 225) interior into the zero-margined (ci, 384)
#          padded buffer via a single matmul (replaces the wrapper-side pads).
#   sel  : gathers the 15x15 interior of the padded grid into a dense 225-wide
#          slab via a single matmul (lane-dense output, no strided stores).
# ----------------------------------------------------------------------------
def _build_position_constants():
    mask = np.zeros((1, BUFW), np.float32)
    scat = np.zeros((NOUT, BUFW), np.float32)
    sel = np.zeros((BUFW, NOUT), np.float32)
    for i in range(H):
        for j in range(H):
            q = MARGIN + (i + 1) * HP + (j + 1)   # buffer column of pixel (i, j)
            p = i * H + j                         # dense interior index
            mask[0, q] = 1.0
            scat[p, q] = 1.0
            sel[q, p] = 1.0
    return jnp.asarray(mask), jnp.asarray(scat), jnp.asarray(sel)


_MASK, _SCAT, _SEL = _build_position_constants()


# ----------------------------------------------------------------------------
# pltpu.roll direction probe (cached, one tiny call per process, outside the
# forward path).  pltpu.roll is documented to match jnp.roll
# (out[i] = x[i - shift]); probe once so the tap->shift mapping stays correct
# even if the convention ever differs on a given backend.
# ----------------------------------------------------------------------------
_ROLL_SIGN = None


def _roll_shift_sign():
    global _ROLL_SIGN
    if _ROLL_SIGN is None:
        def probe(x_ref, o_ref):
            o_ref[...] = pltpu.roll(x_ref[...], 1, axis=1)

        x = jnp.tile(jnp.arange(128, dtype=jnp.float32)[None, :], (8, 1))
        y = pl.pallas_call(
            probe, out_shape=jax.ShapeDtypeStruct((8, 128), jnp.float32))(x)
        v = float(y[0, 1])
        _ROLL_SIGN = -1 if v == 2.0 else 1     # 0.0 -> jnp.roll semantics
    return _ROLL_SIGN


# ----------------------------------------------------------------------------
# Fused two-layer conv kernel (one grid step == one batch element)
# ----------------------------------------------------------------------------
def _leaky_relu(x):
    return jnp.where(x >= 0, x, NEG_SLOPE * x)


def _conv2deep_kernel(x_ref, w1_ref, b1_ref, w2_ref, b2_ref, mask_ref,
                      scat_ref, sel_ref, o_ref, p1_ref, p2_ref, *, roll_sign):
    # tap (kh, kw) needs the input shifted by d = (kh-1)*HP + (kw-1) in the
    # flattened padded grid; shifts (|d| <= 18) never leave a batch's margins
    # for interior reads, and wrap-around only lands in unused columns.
    def tap_rows(src, cin, dst_ref):
        for kh in range(3):
            for kw in range(3):
                t = kh * 3 + kw
                d = (kh - 1) * HP + (kw - 1)
                if d == 0:
                    rolled = src
                else:
                    rolled = pltpu.roll(src, (roll_sign * -d) % BUFW, axis=1)
                dst_ref[t * cin:(t + 1) * cin, :] = rolled

    # ---- in-kernel zero padding: scatter (2, 225) -> (2, 384) --------------
    xbuf = jnp.dot(x_ref[0], scat_ref[...],
                   preferred_element_type=jnp.float32)       # (2, 384)

    # ---- layer 1: Conv2d(2 -> 8) + LeakyReLU ------------------------------
    tap_rows(xbuf, CIN1, p1_ref)                             # (18, 384) patches
    a1 = jnp.dot(w1_ref[...], p1_ref[...],
                 preferred_element_type=jnp.float32)         # (8, 384)
    a1 = _leaky_relu(a1 + b1_ref[...])
    # zero the padded-grid border + margins -> torch zero padding for layer 2
    a1 = a1 * mask_ref[...]

    # ---- layer 2: Conv2d(8 -> 4) + LeakyReLU ------------------------------
    tap_rows(a1, CIN2, p2_ref)                               # (72, 384) patches
    a2 = jnp.dot(w2_ref[...], p2_ref[...],
                 preferred_element_type=jnp.float32)         # (4, 384)
    a2 = _leaky_relu(a2 + b2_ref[...])

    # gather the 15x15 interior into a lane-dense (4, 225) NCHW-ordered slab
    o_ref[0] = jnp.dot(a2, sel_ref[...], preferred_element_type=jnp.float32)


# ----------------------------------------------------------------------------
# Parameter prep (done ONCE, outside the forward path)
# ----------------------------------------------------------------------------
def prepare_params(params):
    """(w1, b1, w2, b2) in torch OIHW layout -> kernel-ready matrices."""
    w1, b1, w2, b2 = params
    # column order (kh*3+kw)*Cin + ci matches the patch-matrix row order.
    wmat1 = jnp.transpose(w1, (0, 2, 3, 1)).reshape(COUT1, 9 * CIN1)  # (8, 18)
    wmat2 = jnp.transpose(w2, (0, 2, 3, 1)).reshape(COUT2, 9 * CIN2)  # (4, 72)
    return (wmat1.astype(jnp.float32), b1.reshape(COUT1, 1).astype(jnp.float32),
            wmat2.astype(jnp.float32), b2.reshape(COUT2, 1).astype(jnp.float32))


# ----------------------------------------------------------------------------
# Forward
# ----------------------------------------------------------------------------
def conv2deep_forward(x_nchw, prepared_params):
    return _conv2deep_forward_jit(x_nchw, prepared_params, _roll_shift_sign())


@functools.partial(jax.jit, static_argnums=(2,))
def _conv2deep_forward_jit(x_nchw, prepared_params, roll_sign):
    wmat1, b1c, wmat2, b2c = prepared_params
    B = x_nchw.shape[0]

    # Only a free, contiguous reshape on the way in; padding happens in-kernel.
    xf = x_nchw.astype(jnp.float32).reshape(B, CIN1, NOUT)   # (B, 2, 225)

    out = pl.pallas_call(
        functools.partial(_conv2deep_kernel, roll_sign=roll_sign),
        out_shape=jax.ShapeDtypeStruct((B, COUT2, NOUT), jnp.float32),
        grid=(B,),
        in_specs=[
            pl.BlockSpec((1, CIN1, NOUT), lambda b: (b, 0, 0)),   # raw input
            pl.BlockSpec((COUT1, 9 * CIN1), lambda b: (0, 0)),    # W1 matrix
            pl.BlockSpec((COUT1, 1), lambda b: (0, 0)),           # b1
            pl.BlockSpec((COUT2, 9 * CIN2), lambda b: (0, 0)),    # W2 matrix
            pl.BlockSpec((COUT2, 1), lambda b: (0, 0)),           # b2
            pl.BlockSpec((1, BUFW), lambda b: (0, 0)),            # interior mask
            pl.BlockSpec((NOUT, BUFW), lambda b: (0, 0)),         # pad scatter
            pl.BlockSpec((BUFW, NOUT), lambda b: (0, 0)),         # interior gather
        ],
        out_specs=pl.BlockSpec((1, COUT2, NOUT), lambda b: (b, 0, 0)),
        scratch_shapes=[
            pltpu.VMEM((9 * CIN1, BUFW), jnp.float32),            # layer-1 patches
            pltpu.VMEM((9 * CIN2, BUFW), jnp.float32),            # layer-2 patches
        ],
        compiler_params=pltpu.CompilerParams(
            dimension_semantics=("parallel",)),
    )(xf, wmat1, b1c, wmat2, b2c, _MASK, _SCAT, _SEL)

    # (B, 4, 225) is already in NCHW order -> free reshape to (B, 900)
    return out.reshape(B, COUT2 * NOUT)


# ----------------------------------------------------------------------------
# Pure-JAX reference (correctness check only)
# ----------------------------------------------------------------------------
def reference_forward(x_nchw, params):
    w1, b1, w2, b2 = params

    def conv(x, w, b):
        y = jax.lax.conv_general_dilated(
            x, w, window_strides=(1, 1), padding=((1, 1), (1, 1)),
            dimension_numbers=("NCHW", "OIHW", "NCHW"))
        y = y + b.reshape(1, -1, 1, 1)
        return jnp.where(y >= 0, y, NEG_SLOPE * y)

    B = x_nchw.shape[0]
    return conv(conv(x_nchw, w1, b1), w2, b2).reshape(B, COUT2 * NOUT)


# ----------------------------------------------------------------------------
def init_params(key):
    """Deterministic PyTorch-style (kaiming-uniform-ish) init in OIHW layout."""
    k1, k2, k3, k4 = jax.random.split(key, 4)
    bd1 = 1.0 / jnp.sqrt(CIN1 * 9)
    bd2 = 1.0 / jnp.sqrt(CIN2 * 9)
    w1 = jax.random.uniform(k1, (COUT1, CIN1, 3, 3), jnp.float32, -bd1, bd1)
    b1 = jax.random.uniform(k2, (COUT1,), jnp.float32, -bd1, bd1)
    w2 = jax.random.uniform(k3, (COUT2, CIN2, 3, 3), jnp.float32, -bd2, bd2)
    b2 = jax.random.uniform(k4, (COUT2,), jnp.float32, -bd2, bd2)
    return (w1, b1, w2, b2)


if __name__ == "__main__":
    key = jax.random.PRNGKey(0)
    pkey, xkey = jax.random.split(key)
    params = init_params(pkey)
    prepared = prepare_params(params)        # hoisted out of the forward path

    # batch=2, channels=2, spatial=15x15 (required so 4*15*15 == 900)
    x = jax.random.normal(xkey, (2, 2, 15, 15), jnp.float32)

    out = jax.block_until_ready(conv2deep_forward(x, prepared))
    ref = jax.block_until_ready(reference_forward(x, params))

    assert out.shape == (2, 900), out.shape
    assert jnp.allclose(out, ref, atol=1e-4, rtol=1e-4), float(
        jnp.max(jnp.abs(out - ref)))
    print("KERNEL_OK")
</pallas_src>

<mosaic_0001>
module attributes {stable_mosaic.version = 11 : i64} {
  func.func @probe(%arg0: memref<8x128xf32, #tpu.memory_space<vmem>>, %arg1: memref<8x128xf32, #tpu.memory_space<vmem>>) attributes {dimension_semantics = [], scalar_prefetch = 0 : i64, scratch_operands = 0 : i64, tpu.core_type = #tpu.core_type<tc>} {
    %c0 = arith.constant 0 : index
    %c0_0 = arith.constant 0 : index
    %0 = vector.load %arg0[%c0, %c0_0] : memref<8x128xf32, #tpu.memory_space<vmem>>, vector<8x128xf32>
    %c1_i32 = arith.constant 1 : i32
    %1 = tpu.dynamic_rotate %0 by %c1_i32 dim 1 : vector<8x128xf32>, i32 -> vector<8x128xf32>
    %c0_1 = arith.constant 0 : index
    %c0_2 = arith.constant 0 : index
    %2 = vector.load %arg1[%c0_1, %c0_2] : memref<8x128xf32, #tpu.memory_space<vmem>>, vector<8x128xf32>
    tpu.vector_store %arg1[%c0_1, %c0_2], %1 {strides = array<i32>} : memref<8x128xf32, #tpu.memory_space<vmem>>, vector<8x128xf32>,
    return
  }
}

</mosaic_0001>

<llo_original>
// kernel: tpu_custom_call.1
$region0: #{tpu_custom_call.1}
  #allocation0 [shape = 'u32[]', space=smem, size = 0x4, offset = 0x4, fixed_abs, tag = 'smem constant byte address 0x4 - core index']
  #allocation1 [shape = 'u32[144,128]{1,0:T(1,128)}', space=vmem, size = 0x12000, scoped, tag = 'internal scratch']
  %s0 = inlined_call_operand.hbm [shape: f32[8,128], index: 0, kind: input, shape index: {}]
  %s1 = inlined_call_operand.hbm [shape: f32[8,128], index: 1, kind: output, shape index: {}]
  %s2 = sld [smem:[#allocation0]]
  $region18: #{tpu_custom_call.1} parent=0
    _
  %s4 = ssub.s32 1, %s2
  %s5 = scalar_select 0, %s4, %s2
  $region1: #{tpu_custom_call.1} parent=0
    #allocation2 [shape = 'u8[4096]{0}', space=vmem, size = 0x1000, scoped, tag = 'input window, operand 0, single buffered']
    #allocation3 [shape = 's32[1]{0}', space=sflag, size = 0x4, scoped, tag = 'scoped memory for tpu_custom_call.1']
    #allocation4 [shape = 's32[1]{0}', space=sflag, size = 0x4, scoped, tag = 'scoped memory for tpu_custom_call.1']
    #allocation5 [shape = 'u8[4096]{0}', space=vmem, size = 0x1000, scoped, tag = 'output window, operand 0, single buffered']
    %6 = vsyncpa [#allocation3], 0
    %7 = vsyncpa [#allocation4], 0
    // Predicated region
    $region2: #{tpu_custom_call.1} parent=1 // pred_check
      _
    $region3: #{tpu_custom_call.1} parent=1 // pred_check_branch
      %9 = sbr.rel (0) target = $region5
    $region4: #{tpu_custom_call.1} parent=1 // pred_region
      %s11 = ssub.s32 128, 128
      %12 = vsyncadd [#allocation3], %s11
      %s14 = sshll.u32 [#allocation2], 4
      %s15 = int_to_ptr.vmem [resolvable:$true] %s14
      %17 = dma.hbm_to_vmem [thread:$0]  %s0, 128, %s15, [#allocation3]
    $region5: #{tpu_custom_call.1} parent=1 // pred_fallthru
      _
    // Predicated region
    $region6: #{tpu_custom_call.1} parent=1 // pred_check
      _
    $region7: #{tpu_custom_call.1} parent=1 // pred_check_branch
      %19 = sbr.rel (0) target = $region9
    $region8: #{tpu_custom_call.1} parent=1 // pred_region
      %20 = dma.done [#allocation3], 128
    $region9: #{tpu_custom_call.1} parent=1 // pred_fallthru
      _
    %v21 = vld [vmem:[#allocation2] sm:$0xff]
    %22 = vrot.lane.b32.xlu0 %v21, 1
    %v23 = vpop.permute.xlu0 %22
    %24 = vst [vmem:[#allocation5] sm:$0xff] %v23
    // Predicated region
    $region10: #{tpu_custom_call.1} parent=1 // pred_check
      _
    $region11: #{tpu_custom_call.1} parent=1 // pred_check_branch
      %26 = sbr.rel (0) target = $region13
    $region12: #{tpu_custom_call.1} parent=1 // pred_region
      %s28 = ssub.s32 128, 128
      %29 = vsyncadd [#allocation4], %s28
      %s31 = sshll.u32 [#allocation5], 4
      %s32 = int_to_ptr.vmem [resolvable:$true] %s31
      %34 = dma.vmem_to_hbm [thread:$0]  %s32, 128, %s1, [#allocation4]
    $region13: #{tpu_custom_call.1} parent=1 // pred_fallthru
      _
    // Predicated region
    $region14: #{tpu_custom_call.1} parent=1 // pred_check
      _
    $region15: #{tpu_custom_call.1} parent=1 // pred_check_branch
      %36 = sbr.rel (0) target = $region17
    $region16: #{tpu_custom_call.1} parent=1 // pred_region
      %37 = dma.done [#allocation4], 128
    $region17: #{tpu_custom_call.1} parent=1 // pred_fallthru
      _
    %38 = vsyncpa [#allocation3], 1
    %39 = vsyncpa [#allocation4], 1

</llo_original>
